<compile_context>
chip_gen: v5e
topology: v5e:2x2
jax: 0.10.0
libtpu: 0.0.40
codegen_flags: <defaults>
</compile_context>

<pallas_src>
import jax
import jax.numpy as jnp
from jax.experimental import pallas as pl
from jax.experimental.pallas import tpu as pltpu


# ----------------------------------------------------------------------------
# Kernel
# ----------------------------------------------------------------------------
def policy_cnn_kernel(x_ref, w1_ref, b1_ref, w2_ref, b2_ref, w3_ref, b3_ref, o_ref):
    """One row-tile of the fused conv1->ReLU->conv2->ReLU->conv3->(*100) chain.

      x_ref : (FW, TILE_R) bf16   price tile, features on sublanes, rows on lanes
      w1_ref: (C1, FW)     bf16   conv1 (1,3) as a dense Toeplitz operator (transposed)
      b1_ref: (C1, 1)      f32
      w2_ref: (32, C1)     bf16   conv2 (1, W-2) with the time axis collapsed
      b2_ref: (32, 1)      f32
      w3_ref: (32, 1)      f32    conv3 1x1 column, *100 pre-folded (kept f32)
      b3_ref: (1, 1)       f32    conv3 bias, *100 pre-folded
      o_ref : (1, TILE_R)  f32    lane-dense output row
    """
    x = x_ref[...]
    # conv1 (1,3) + bias + ReLU -> (C1, TILE_R); f32 accumulation on the MXU.
    h1 = jnp.dot(w1_ref[...], x, preferred_element_type=jnp.float32) + b1_ref[...]
    h1 = jnp.maximum(h1, 0.0)
    # conv2 (1, W-2) + bias + ReLU -> (32, TILE_R).
    h2 = jnp.dot(w2_ref[...], h1.astype(jnp.bfloat16),
                 preferred_element_type=jnp.float32) + b2_ref[...]
    h2 = jnp.maximum(h2, 0.0)
    # conv3 (1x1) + bias, *100 already folded: done OFF the MXU as a VPU
    # broadcast-multiply plus an XLU reduction over the 32-channel sublane axis
    # (both units are otherwise idle), and entirely in f32 for accuracy.
    o_ref[...] = jnp.sum(w3_ref[...] * h2, axis=0, keepdims=True) + b3_ref[...]
    # TODO(synk): if TILE_R is ever pushed past VMEM limits, wrap the chain in a
    # lax.fori_loop over lane sub-chunks instead of shrinking the DMA tile.


# ----------------------------------------------------------------------------
# Constant-weight preprocessing (hoisted out of the per-call path)
# ----------------------------------------------------------------------------
def build_conv1_toeplitz(w1_sq, F, W):
    """w1_sq: (4, F, 3) -> dense (F*W, 4*T) Toeplitz operator, T = W - 2.

    Column index is c*T + t (channel-major, time-minor).  This ordering MUST
    match jnp.repeat(b1, T) and the (32, 4, 1, T) -> (32, 4*T) reshape of w2.
    """
    T = W - 2
    # shifts[k, w, t] = 1 iff w == t + k
    shifts = jnp.stack([jnp.eye(W, T, -k, dtype=jnp.float32) for k in range(3)])  # (3, W, T)
    blocks = jnp.einsum('cfk,kwt->fwct', w1_sq.astype(jnp.float32), shifts)        # (F, W, 4, T)
    return blocks.reshape(F * W, 4 * T)


def prepare_params(params, feature_num, window_size):
    """One-time re-layout of the PyTorch Conv2d parameters for the kernel."""
    w1, b1, w2, b2, w3, b3 = params
    F, W = feature_num, window_size
    T = W - 2
    C1 = 4 * T
    w1_t = build_conv1_toeplitz(jnp.reshape(w1, (4, F, 3)), F, W).T.astype(jnp.bfloat16)  # (C1, FW)
    b1_c = jnp.repeat(jnp.asarray(b1, jnp.float32), T).reshape(C1, 1)                     # (C1, 1)
    w2_m = jnp.reshape(w2, (32, C1)).astype(jnp.bfloat16)                                 # (32, C1)
    b2_c = jnp.asarray(b2, jnp.float32).reshape(32, 1)                                    # (32, 1)
    # Fold the *100 output scale into conv3, kept in f32 (accuracy fix).
    w3_c = jnp.reshape(w3, (32, 1)).astype(jnp.float32) * 100.0                           # (32, 1)
    b3_c = jnp.reshape(b3, (1, 1)).astype(jnp.float32) * 100.0                            # (1, 1)
    return (w1_t, b1_c, w2_m, b2_c, w3_c, b3_c)


# ----------------------------------------------------------------------------
# Tiling policy
# ----------------------------------------------------------------------------
_LANE = 128
_MAX_TILE_R = 16 * 1024   # ~11-13 MiB/step VMEM -> fits v7x's 64 MiB with headroom


def _round_up(x, m):
    return (x + m - 1) // m * m


def _pick_tile_r(R):
    """Row-tile size: big enough to amortize the ~0.35us per-grid-step overhead,
    small enough for v7x's 64 MiB VMEM; >= 2 balanced tiles when the problem is
    big enough so both v7x TensorCores get work (harmless on v5e/v6e)."""
    if R <= _MAX_TILE_R:
        tile = _round_up(R, _LANE)
        if tile >= 2048:                         # enough work to split across 2 TCs
            tile = _round_up(-(-tile // 2), _LANE)
    else:
        n = -(-R // _MAX_TILE_R)
        n += n % 2                               # even tile count for v7x's 2 TCs
        tile = _round_up(-(-R // n), _LANE)
    return tile


# ----------------------------------------------------------------------------
# Forward
# ----------------------------------------------------------------------------
@jax.jit
def policy_cnn_forward(price, prepared):
    """price: (N, A, F, W) float32 -- torch state['price'] before .transpose(1, 2)."""
    w1_t, b1_c, w2_m, b2_c, w3_c, b3_c = prepared
    N, A, F, W = price.shape
    C1, FW = w1_t.shape
    R = N * A

    TILE_R = _pick_tile_r(R)
    num_tiles = -(-R // TILE_R)
    R_pad = num_tiles * TILE_R

    # ---- glue: one fused relayout pass over price (transpose + pad + cast) ----
    # The (1,k) convs act independently per (n, a) row, so flatten rows
    # n-major / a-minor (same order as torch's final x.view(-1)) and put them on
    # the lane axis: x_cols[f*W + w, n*A + a].  XLA fuses the transpose, the
    # tail pad and the bf16 cast into a single read->write pass.
    # TODO(synk): this pass is the largest remaining HBM cost (~2x the kernel's
    # own traffic); have the producer emit price already as an (F*W, R) bf16
    # slab to remove it entirely.
    x_cols = price.reshape(R, FW).T
    if R_pad != R:
        x_cols = jnp.pad(x_cols, ((0, 0), (0, R_pad - R)))
    x_cols = x_cols.astype(jnp.bfloat16)

    out = pl.pallas_call(
        policy_cnn_kernel,
        out_shape=jax.ShapeDtypeStruct((1, R_pad), jnp.float32),
        grid=(num_tiles,),
        in_specs=[
            # streamed price tile: double-buffered HBM->VMEM DMA overlaps compute
            pl.BlockSpec((FW, TILE_R), lambda i: (0, i)),
            # constant operators: constant index_map -> stay VMEM-resident
            pl.BlockSpec((C1, FW), lambda i: (0, 0)),
            pl.BlockSpec((C1, 1), lambda i: (0, 0)),
            pl.BlockSpec((32, C1), lambda i: (0, 0)),
            pl.BlockSpec((32, 1), lambda i: (0, 0)),
            pl.BlockSpec((32, 1), lambda i: (0, 0)),
            pl.BlockSpec((1, 1), lambda i: (0, 0)),
        ],
        out_specs=pl.BlockSpec((1, TILE_R), lambda i: (0, i)),   # lane-dense output
        compiler_params=pltpu.CompilerParams(
            # Independent row tiles: shard across v7x's two TensorCores
            # (no-op on single-core v5e/v6e).
            # TODO(synk): try pltpu.CORE_PARALLEL on v7x if "parallel" does not
            # actually split the 1-D grid across cores.
            dimension_semantics=("parallel",),
            # Explicit limit >> ~13 MiB/step footprint; also covers v5e's 16 MiB
            # scoped default and stays within v7x's 64 MiB physical VMEM.
            vmem_limit_bytes=48 * 1024 * 1024,
        ),
    )(x_cols, w1_t, b1_c, w2_m, b2_c, w3_c, b3_c)

    return out.reshape(-1)[:R]   # matches torch x.view(-1)


# ----------------------------------------------------------------------------
# Pure-JAX reference (reproduces the PyTorch module exactly, all f32)
# ----------------------------------------------------------------------------
def ref_forward(price, params):
    w1, b1, w2, b2, w3, b3 = params
    x = jnp.transpose(price, (0, 2, 1, 3))  # .transpose(1, 2) -> NCHW

    def conv(h, w, b):
        y = jax.lax.conv_general_dilated(
            h, w, window_strides=(1, 1), padding="VALID",
            dimension_numbers=("NCHW", "OIHW", "NCHW"))
        return y + b[None, :, None, None]

    h = jax.nn.relu(conv(x, w1, b1))
    h = jax.nn.relu(conv(h, w2, b2))
    h = conv(h, w3, b3)
    return h.reshape(-1) * 100.0


if __name__ == "__main__":
    # N=batch, A=assets (the conv "H" axis), F=feature_num, W=window_size
    N, A, F, W = 2, 4, 1, 16
    T = W - 2

    key = jax.random.PRNGKey(0)
    ks = jax.random.split(key, 7)
    price = jax.random.normal(ks[0], (N, A, F, W), dtype=jnp.float32)

    # Deterministic synthetic parameters (Conv2d weight shapes: (out, in, kh, kw)).
    w1 = 0.1 * jax.random.normal(ks[1], (4, F, 1, 3), dtype=jnp.float32)
    b1 = 0.1 * jax.random.normal(ks[2], (4,), dtype=jnp.float32)
    w2 = 0.1 * jax.random.normal(ks[3], (32, 4, 1, T), dtype=jnp.float32)
    b2 = 0.1 * jax.random.normal(ks[4], (32,), dtype=jnp.float32)
    w3 = 0.1 * jax.random.normal(ks[5], (1, 32, 1, 1), dtype=jnp.float32)
    b3 = 0.1 * jax.random.normal(ks[6], (1,), dtype=jnp.float32)
    params = (w1, b1, w2, b2, w3, b3)

    prepared = prepare_params(params, F, W)                 # one-time weight re-layout
    out = jax.block_until_ready(policy_cnn_forward(price, prepared))
    ref = jax.block_until_ready(ref_forward(price, params))

    assert out.shape == (N * A,), out.shape
    # conv1/conv2 run in bf16 (f32 accumulation); conv3 and the *100 scale are f32,
    # so only mild bf16 rounding remains versus the pure-f32 reference.
    assert jnp.allclose(out, ref, atol=0.3, rtol=0.03), (out, ref)
    print("KERNEL_OK")
</pallas_src>

<mosaic_0001>
module attributes {stable_mosaic.version = 11 : i64} {
  func.func @policy_cnn_kernel(%arg0: i32, %arg1: memref<16x128xbf16, #tpu.memory_space<vmem>>, %arg2: memref<56x16xbf16, #tpu.memory_space<vmem>>, %arg3: memref<56x1xf32, #tpu.memory_space<vmem>>, %arg4: memref<32x56xbf16, #tpu.memory_space<vmem>>, %arg5: memref<32x1xf32, #tpu.memory_space<vmem>>, %arg6: memref<32x1xf32, #tpu.memory_space<vmem>>, %arg7: memref<1x1xf32, #tpu.memory_space<vmem>>, %arg8: memref<1x128xf32, #tpu.memory_space<vmem>>) attributes {dimension_semantics = [#tpu.dimension_semantics<parallel>], iteration_bounds = array<i64: 1>, scalar_prefetch = 0 : i64, scratch_operands = 0 : i64, tpu.core_type = #tpu.core_type<tc>, window_params = [{transform_indices = @transform_0, window_bounds = array<i64: 16, 128>}, {pipeline_mode = #tpu.pipeline_mode<synchronous>, transform_indices = @transform_1, window_bounds = array<i64: 56, 16>}, {pipeline_mode = #tpu.pipeline_mode<synchronous>, transform_indices = @transform_2, window_bounds = array<i64: 56, 1>}, {pipeline_mode = #tpu.pipeline_mode<synchronous>, transform_indices = @transform_3, window_bounds = array<i64: 32, 56>}, {pipeline_mode = #tpu.pipeline_mode<synchronous>, transform_indices = @transform_4, window_bounds = array<i64: 32, 1>}, {pipeline_mode = #tpu.pipeline_mode<synchronous>, transform_indices = @transform_5, window_bounds = array<i64: 32, 1>}, {pipeline_mode = #tpu.pipeline_mode<synchronous>, transform_indices = @transform_6, window_bounds = array<i64: 1, 1>}, {transform_indices = @transform_7, window_bounds = array<i64: 1, 128>}]} {
    %c0 = arith.constant 0 : index
    %c0_0 = arith.constant 0 : index
    %0 = vector.load %arg1[%c0, %c0_0] : memref<16x128xbf16, #tpu.memory_space<vmem>>, vector<16x128xbf16>
    %c0_1 = arith.constant 0 : index
    %c0_2 = arith.constant 0 : index
    %1 = vector.load %arg2[%c0_1, %c0_2] : memref<56x16xbf16, #tpu.memory_space<vmem>>, vector<56x16xbf16>
    %cst = arith.constant dense<0.000000e+00> : vector<56x128xf32>
    %2 = tpu.matmul %1, %0, %cst {dimension_numbers = #tpu.dot_dimension_numbers<[1], [0], [0], [1], [0, 0, 1, 1], [], []>} : vector<56x16xbf16>, vector<16x128xbf16>, vector<56x128xf32> -> vector<56x128xf32>
    %c0_3 = arith.constant 0 : index
    %c0_4 = arith.constant 0 : index
    %3 = vector.load %arg3[%c0_3, %c0_4] : memref<56x1xf32, #tpu.memory_space<vmem>>, vector<56x1xf32>
    %4 = vector.broadcast %3 : vector<56x1xf32> to vector<56x128xf32>
    %5 = arith.addf %2, %4 : vector<56x128xf32>
    %cst_5 = arith.constant 0.000000e+00 : f32
    %6 = vector.broadcast %cst_5 : f32 to vector<56x128xf32>
    %7 = arith.maximumf %5, %6 : vector<56x128xf32>
    %c0_6 = arith.constant 0 : index
    %c0_7 = arith.constant 0 : index
    %8 = vector.load %arg4[%c0_6, %c0_7] : memref<32x56xbf16, #tpu.memory_space<vmem>>, vector<32x56xbf16>
    %9 = arith.truncf %7 : vector<56x128xf32> to vector<56x128xbf16>
    %cst_8 = arith.constant dense<0.000000e+00> : vector<32x128xf32>
    %10 = tpu.matmul %8, %9, %cst_8 {dimension_numbers = #tpu.dot_dimension_numbers<[1], [0], [0], [1], [0, 0, 1, 1], [], []>} : vector<32x56xbf16>, vector<56x128xbf16>, vector<32x128xf32> -> vector<32x128xf32>
    %c0_9 = arith.constant 0 : index
    %c0_10 = arith.constant 0 : index
    %11 = vector.load %arg5[%c0_9, %c0_10] : memref<32x1xf32, #tpu.memory_space<vmem>>, vector<32x1xf32>
    %12 = vector.broadcast %11 : vector<32x1xf32> to vector<32x128xf32>
    %13 = arith.addf %10, %12 : vector<32x128xf32>
    %cst_11 = arith.constant 0.000000e+00 : f32
    %14 = vector.broadcast %cst_11 : f32 to vector<32x128xf32>
    %15 = arith.maximumf %13, %14 : vector<32x128xf32>
    %c0_12 = arith.constant 0 : index
    %c0_13 = arith.constant 0 : index
    %16 = vector.load %arg6[%c0_12, %c0_13] : memref<32x1xf32, #tpu.memory_space<vmem>>, vector<32x1xf32>
    %17 = vector.broadcast %16 : vector<32x1xf32> to vector<32x128xf32>
    %18 = arith.mulf %17, %15 : vector<32x128xf32>
    %cst_14 = arith.constant dense<0.000000e+00> : vector<128xf32>
    %19 = vector.multi_reduction <add>, %18, %cst_14 [0] : vector<32x128xf32> to vector<128xf32>
    %20 = vector.shape_cast %19 : vector<128xf32> to vector<1x128xf32>
    %c0_15 = arith.constant 0 : index
    %c0_16 = arith.constant 0 : index
    %21 = vector.load %arg7[%c0_15, %c0_16] : memref<1x1xf32, #tpu.memory_space<vmem>>, vector<1x1xf32>
    %22 = vector.broadcast %21 : vector<1x1xf32> to vector<1x128xf32>
    %23 = arith.addf %20, %22 : vector<1x128xf32>
    %c0_17 = arith.constant 0 : index
    %c0_18 = arith.constant 0 : index
    %24 = vector.load %arg8[%c0_17, %c0_18] : memref<1x128xf32, #tpu.memory_space<vmem>>, vector<1x128xf32>
    tpu.vector_store %arg8[%c0_17, %c0_18], %23 {strides = array<i32>} : memref<1x128xf32, #tpu.memory_space<vmem>>, vector<1x128xf32>,
    return
  }
  func.func @transform_0(%arg0: i32) -> (i32, i32) {
    %c0_i32 = arith.constant 0 : i32
    %c0_i32_0 = arith.constant 0 : i32
    return %c0_i32, %arg0 : i32, i32
  }
  func.func @transform_1(%arg0: i32) -> (i32, i32) {
    %c0_i32 = arith.constant 0 : i32
    %c0_i32_0 = arith.constant 0 : i32
    %c0_i32_1 = arith.constant 0 : i32
    return %c0_i32, %c0_i32_0 : i32, i32
  }
  func.func @transform_2(%arg0: i32) -> (i32, i32) {
    %c0_i32 = arith.constant 0 : i32
    %c0_i32_0 = arith.constant 0 : i32
    %c0_i32_1 = arith.constant 0 : i32
    return %c0_i32, %c0_i32_0 : i32, i32
  }
  func.func @transform_3(%arg0: i32) -> (i32, i32) {
    %c0_i32 = arith.constant 0 : i32
    %c0_i32_0 = arith.constant 0 : i32
    %c0_i32_1 = arith.constant 0 : i32
    return %c0_i32, %c0_i32_0 : i32, i32
  }
  func.func @transform_4(%arg0: i32) -> (i32, i32) {
    %c0_i32 = arith.constant 0 : i32
    %c0_i32_0 = arith.constant 0 : i32
    %c0_i32_1 = arith.constant 0 : i32
    return %c0_i32, %c0_i32_0 : i32, i32
  }
  func.func @transform_5(%arg0: i32) -> (i32, i32) {
    %c0_i32 = arith.constant 0 : i32
    %c0_i32_0 = arith.constant 0 : i32
    %c0_i32_1 = arith.constant 0 : i32
    return %c0_i32, %c0_i32_0 : i32, i32
  }
  func.func @transform_6(%arg0: i32) -> (i32, i32) {
    %c0_i32 = arith.constant 0 : i32
    %c0_i32_0 = arith.constant 0 : i32
    %c0_i32_1 = arith.constant 0 : i32
    return %c0_i32, %c0_i32_0 : i32, i32
  }
  func.func @transform_7(%arg0: i32) -> (i32, i32) {
    %c0_i32 = arith.constant 0 : i32
    %c0_i32_0 = arith.constant 0 : i32
    return %c0_i32, %arg0 : i32, i32
  }
}

</mosaic_0001>

<llo_original>
// kernel: policy_cnn_forward.1
$region0: #{policy_cnn_forward.1}
  #allocation0 [shape = 'u32[]', space=smem, size = 0x4, offset = 0x4, fixed_abs, tag = 'smem constant byte address 0x4 - core index']
  #allocation1 [shape = 'u32[72,128]{1,0:T(1,128)}', space=vmem, size = 0x9000, scoped, tag = 'internal scratch']
  #allocation2 [shape = 'f32[1,1]{1,0:T(1,128)S(1)}', space=vmem, size = 0x200, scoped, tag = 'scoped memory for policy_cnn_forward.1']
  %s0 = inlined_call_operand.vmem [shape: bf16[16,128], index: 0, kind: input, shape index: {}]
  %s1 = inlined_call_operand.vmem [shape: bf16[56,16], index: 1, kind: input, shape index: {}]
  %s2 = inlined_call_operand.vmem [shape: f32[56,1], index: 2, kind: input, shape index: {}]
  %s3 = inlined_call_operand.vmem [shape: bf16[32,56], index: 3, kind: input, shape index: {}]
  %s4 = inlined_call_operand.vmem [shape: f32[32,1], index: 4, kind: input, shape index: {}]
  %s5 = inlined_call_operand.vmem [shape: f32[32,1], index: 5, kind: input, shape index: {}]
  %s6 = inlined_call_operand.<no memory space> [shape: f32[1,1], index: 6, kind: input, shape index: {}]
  %s7 = inlined_call_operand.vmem [shape: f32[1,128], index: 7, kind: output, shape index: {}]
  %s8 = sld [smem:[#allocation0]]
  $region38: #{policy_cnn_forward.1} parent=0
    _
  %s10 = ssub.s32 1, %s8
  %s11 = scalar_select 0, %s10, %s8
  %v12 = vstv %s6
  %13 = vst [vmem:[#allocation2] sm:$0x1] %v12
  // Predicated region
  $region2: #{policy_cnn_forward.1} parent=0 // pred_check
    _
  $region3: #{policy_cnn_forward.1} parent=0 // pred_check_branch
    %15 = sbr.rel (0) target = $region5
  $region4: #{policy_cnn_forward.1} parent=0 // pred_region
    _
  $region5: #{policy_cnn_forward.1} parent=0 // pred_fallthru
    _
  // Predicated region
  $region6: #{policy_cnn_forward.1} parent=0 // pred_check
    _
  $region7: #{policy_cnn_forward.1} parent=0 // pred_check_branch
    %17 = sbr.rel (0) target = $region9
  $region8: #{policy_cnn_forward.1} parent=0 // pred_region
    _
  $region9: #{policy_cnn_forward.1} parent=0 // pred_fallthru
    _
  // Predicated region
  $region10: #{policy_cnn_forward.1} parent=0 // pred_check
    _
  $region11: #{policy_cnn_forward.1} parent=0 // pred_check_branch
    %19 = sbr.rel (0) target = $region13
  $region12: #{policy_cnn_forward.1} parent=0 // pred_region
    _
  $region13: #{policy_cnn_forward.1} parent=0 // pred_fallthru
    _
  // Predicated region
  $region14: #{policy_cnn_forward.1} parent=0 // pred_check
    _
  $region15: #{policy_cnn_forward.1} parent=0 // pred_check_branch
    %21 = sbr.rel (0) target = $region17
  $region16: #{policy_cnn_forward.1} parent=0 // pred_region
    _
  $region17: #{policy_cnn_forward.1} parent=0 // pred_fallthru
    _
  // Predicated region
  $region18: #{policy_cnn_forward.1} parent=0 // pred_check
    _
  $region19: #{policy_cnn_forward.1} parent=0 // pred_check_branch
    %23 = sbr.rel (0) target = $region21
  $region20: #{policy_cnn_forward.1} parent=0 // pred_region
    _
  $region21: #{policy_cnn_forward.1} parent=0 // pred_fallthru
    _
  // Predicated region
  $region22: #{policy_cnn_forward.1} parent=0 // pred_check
    _
  $region23: #{policy_cnn_forward.1} parent=0 // pred_check_branch
    %25 = sbr.rel (0) target = $region25
  $region24: #{policy_cnn_forward.1} parent=0 // pred_region
    _
  $region25: #{policy_cnn_forward.1} parent=0 // pred_fallthru
    _
  // Predicated region
  $region26: #{policy_cnn_forward.1} parent=0 // pred_check
    _
  $region27: #{policy_cnn_forward.1} parent=0 // pred_check_branch
    %27 = sbr.rel (0) target = $region29
  $region28: #{policy_cnn_forward.1} parent=0 // pred_region
    _
  $region29: #{policy_cnn_forward.1} parent=0 // pred_fallthru
    _
  %v29 = vld [vmem:[%s0] sm:$0xf]
  %v30 = vld [vmem:[%s0 + $0x4] sm:$0xf]
  %v31 = vld [vmem:[%s1] sm:$0xf]
  %v32 = vld [vmem:[%s1 + $0x4] sm:$0xf]
  %v33 = vld [vmem:[%s1 + $0x8] sm:$0xf]
  %v34 = vld [vmem:[%s1 + $0xc] sm:$0xf]
  %v35 = vld [vmem:[%s1 + $0x10] sm:$0xf]
  %v36 = vld [vmem:[%s1 + $0x14] sm:$0xf]
  %v37 = vld [vmem:[%s1 + $0x18] sm:$0xf]
  %v38 = vld [vmem:[%s2] sm:$0xff]
  %v39 = vld [vmem:[%s2 + $0x8] sm:$0xff]
  %v40 = vld [vmem:[%s2 + $0x10] sm:$0xff]
  %v41 = vld [vmem:[%s2 + $0x18] sm:$0xff]
  %v42 = vld [vmem:[%s2 + $0x20] sm:$0xff]
  %v43 = vld [vmem:[%s2 + $0x28] sm:$0xff]
  %v44 = vld [vmem:[%s2 + $0x30] sm:$0xff]
  %46 = vset.pattern.permute.xlu0 0
  %47 = vperm.xlu0 %46, %v38
  %v48 = vpop.permute.xlu0 %47
  %51 = vset.pattern.permute.xlu0 0
  %52 = vperm.xlu0 %51, %v39
  %v53 = vpop.permute.xlu0 %52
  %56 = vset.pattern.permute.xlu0 0
  %57 = vperm.xlu0 %56, %v40
  %v58 = vpop.permute.xlu0 %57
  %61 = vset.pattern.permute.xlu0 0
  %62 = vperm.xlu0 %61, %v41
  %v63 = vpop.permute.xlu0 %62
  %66 = vset.pattern.permute.xlu0 0
  %67 = vperm.xlu0 %66, %v42
  %v68 = vpop.permute.xlu0 %67
  %71 = vset.pattern.permute.xlu0 0
  %72 = vperm.xlu0 %71, %v43
  %v73 = vpop.permute.xlu0 %72
  %76 = vset.pattern.permute.xlu0 0
  %77 = vperm.xlu0 %76, %v44
  %v78 = vpop.permute.xlu0 %77
  %v87 = vunpack.c.l.b16 %v31
  %v88 = vunpack.c.l.b16 %v32
  %v89 = vunpack.c.l.b16 %v33
  %v90 = vunpack.c.l.b16 %v34
  %v91 = vunpack.c.l.b16 %v35
  %v92 = vunpack.c.l.b16 %v36
  %v93 = vunpack.c.l.b16 %v37
  %v94 = vpack.c.b16 %v88, %v87
  %v95 = vpack.c.b16 %v90, %v89
  %v96 = vpack.c.b16 %v92, %v91
  %v97 = vpack.c.b16 %v93, %v93
  %v100 = vunpack.c.l.b16 %v29
  %v101 = vunpack.c.l.b16 %v30
  %v102 = vpack.c.b16 %v101, %v100
  %vm104 = vcmask 130048
  %v106 = vsel %vm104, %v94, 0
  %v109 = vsel %vm104, %v95, 0
  %v112 = vsel %vm104, %v96, 0
  %v115 = vsel %vm104, %v97, 0
  %117 = vmatpush.bf16.msra.mxu0 0
  %118 = vmatpush.bf16.msra.mxu0 0
  %119 = vmatpush.bf16.msra.mxu0 0
  %120 = vmatpush.bf16.msra.mxu0 0
  %121 = vmatpush.bf16.msra.mxu0 0
  %122 = vmatpush.bf16.msra.mxu0 0
  %123 = vmatpush.bf16.msra.mxu0 0
  %124 = vmatpush.bf16.msra.mxu0 %v102
  %125 = vmatmul.bf16.gmra.mxu0 %v106
  %v126 = vpop.f32.mrf.mxu0
  %v127 = vadd.f32 %v48, %v126
  %v128 = vpop.f32.mrf.mxu0
  %v129 = vadd.f32 %v53, %v128
  %130 = vmatmul.bf16.gmra.mxu0 %v109
  %v131 = vpop.f32.mrf.mxu0
  %v132 = vadd.f32 %v58, %v131
  %v133 = vpop.f32.mrf.mxu0
  %v134 = vadd.f32 %v63, %v133
  %135 = vmatmul.bf16.gmra.mxu0 %v112
  %v136 = vpop.f32.mrf.mxu0
  %v137 = vadd.f32 %v68, %v136
  %v138 = vpop.f32.mrf.mxu0
  %v139 = vadd.f32 %v73, %v138
  %140 = vmatmul.bf16.gmra.mxu0 %v115
  %v141 = vpop.f32.mrf.mxu0
  %v142 = vadd.f32 %v78, %v141
  %v143 = vpop.f32.mrf.mxu0
  %144 = vdwg.mxu0
  %v145 = vmax.f32 %v127, 0.0
  %v146 = vmax.f32 %v129, 0.0
  %v147 = vmax.f32 %v132, 0.0
  %v148 = vmax.f32 %v134, 0.0
  %v149 = vmax.f32 %v137, 0.0
  %v150 = vmax.f32 %v139, 0.0
  %v151 = vmax.f32 %v142, 0.0
  %v152 = vld [vmem:[%s3] sm:$0xf]
  %v153 = vld [vmem:[%s3 + $0x4] sm:$0xf]
  %v154 = vld [vmem:[%s3 + $0x8] sm:$0xf]
  %v155 = vld [vmem:[%s3 + $0xc] sm:$0xf]
  %v156 = vpack.c.bf16 %v146, %v145
  %v157 = vpack.c.bf16 %v148, %v147
  %v158 = vpack.c.bf16 %v150, %v149
  %v159 = vpack.c.bf16 %v151, %v151
  %v160 = vld [vmem:[%s4] sm:$0xff]
  %v161 = vld [vmem:[%s4 + $0x8] sm:$0xff]
  %v162 = vld [vmem:[%s4 + $0x10] sm:$0xff]
  %v163 = vld [vmem:[%s4 + $0x18] sm:$0xff]
  %165 = vset.pattern.permute.xlu0 0
  %166 = vperm.xlu0 %165, %v160
  %v167 = vpop.permute.xlu0 %166
  %170 = vset.pattern.permute.xlu0 0
  %171 = vperm.xlu0 %170, %v161
  %v172 = vpop.permute.xlu0 %171
  %175 = vset.pattern.permute.xlu0 0
  %176 = vperm.xlu0 %175, %v162
  %v177 = vpop.permute.xlu0 %176
  %180 = vset.pattern.permute.xlu0 0
  %181 = vperm.xlu0 %180, %v163
  %v182 = vpop.permute.xlu0 %181
  %v188 = vunpack.c.l.b16 %v152
  %v189 = vunpack.c.l.b16 %v153
  %v190 = vunpack.c.l.b16 %v154
  %v191 = vunpack.c.l.b16 %v155
  %v192 = vpack.c.b16 %v189, %v188
  %v193 = vpack.c.b16 %v191, %v190
  %vm194 = vcmask 457728
  %v196 = vsel %vm194, %v192, 0
  %v199 = vsel %vm194, %v193, 0
  %vm201 = vcmask 1043456
  %v203 = vsel %vm201, %v159, 0
  %205 = vmatpush.bf16.msra.mxu0 0
  %206 = vmatpush.bf16.msra.mxu0 0
  %207 = vmatpush.bf16.msra.mxu0 0
  %208 = vmatpush.bf16.msra.mxu0 0
  %209 = vmatpush.bf16.msra.mxu0 %v203
  %210 = vmatpush.bf16.msra.mxu0 %v158
  %211 = vmatpush.bf16.msra.mxu0 %v157
  %212 = vmatpush.bf16.msra.mxu0 %v156
  %213 = vmatmul.bf16.gmra.mxu0 %v196
  %v214 = vpop.f32.mrf.mxu0
  %v215 = vadd.f32 %v167, %v214
  %v216 = vpop.f32.mrf.mxu0
  %v217 = vadd.f32 %v172, %v216
  %218 = vmatmul.bf16.gmra.mxu0 %v199
  %v219 = vpop.f32.mrf.mxu0
  %v220 = vadd.f32 %v177, %v219
  %v221 = vpop.f32.mrf.mxu0
  %v222 = vadd.f32 %v182, %v221
  %223 = vdwg.mxu0
  %v224 = vmax.f32 %v215, 0.0
  %v225 = vmax.f32 %v217, 0.0
  %v226 = vmax.f32 %v220, 0.0
  %v227 = vmax.f32 %v222, 0.0
  %v228 = vld [vmem:[%s5] sm:$0xff]
  %v229 = vld [vmem:[%s5 + $0x8] sm:$0xff]
  %v230 = vld [vmem:[%s5 + $0x10] sm:$0xff]
  %v231 = vld [vmem:[%s5 + $0x18] sm:$0xff]
  %233 = vset.pattern.permute.xlu0 0
  %234 = vperm.xlu0 %233, %v228
  %v235 = vpop.permute.xlu0 %234
  %238 = vset.pattern.permute.xlu0 0
  %239 = vperm.xlu0 %238, %v229
  %v240 = vpop.permute.xlu0 %239
  %243 = vset.pattern.permute.xlu0 0
  %244 = vperm.xlu0 %243, %v230
  %v245 = vpop.permute.xlu0 %244
  %248 = vset.pattern.permute.xlu0 0
  %249 = vperm.xlu0 %248, %v231
  %v250 = vpop.permute.xlu0 %249
  %v252 = vmul.f32 %v235, %v224
  %v253 = vmul.f32 %v240, %v225
  %v254 = vmul.f32 %v245, %v226
  %v255 = vmul.f32 %v250, %v227
  %v256 = vadd.f32 %v252, %v253
  %v257 = vadd.f32 %v256, %v254
  %v258 = vadd.f32 %v257, %v255
  %v259 = vrot.slane %v258, 4
  %v260 = vadd.f32 %v258, %v259
  %v261 = vrot.slane %v260, 2
  %v262 = vadd.f32 %v260, %v261
  %v263 = vrot.slane %v262, 1
  %v264 = vadd.f32 %v262, %v263
  %v265 = vld [vmem:[#allocation2] sm:$0x1]
  %267 = vset.pattern.permute.xlu0 0
  %268 = vperm.xlu0 %267, %v265
  %v269 = vpop.permute.xlu0 %268
  %v271 = vperm.slane %v269, 0
  %v272 = vadd.f32 %v264, %v271
  %273 = vst [vmem:[%s7] sm:$0x1] %v272
  // Predicated region
  $region30: #{policy_cnn_forward.1} parent=0 // pred_check
    _
  $region31: #{policy_cnn_forward.1} parent=0 // pred_check_branch
    %275 = sbr.rel (0) target = $region33
  $region32: #{policy_cnn_forward.1} parent=0 // pred_region
    _
  $region33: #{policy_cnn_forward.1} parent=0 // pred_fallthru
    _
  // Predicated region
  $region34: #{policy_cnn_forward.1} parent=0 // pred_check
    _
  $region35: #{policy_cnn_forward.1} parent=0 // pred_check_branch
    %277 = sbr.rel (0) target = $region37
  $region36: #{policy_cnn_forward.1} parent=0 // pred_region
    _
  $region37: #{policy_cnn_forward.1} parent=0 // pred_fallthru
    _

</llo_original>
